<compile_context>
chip_gen: v7x
topology: tpu7x:2x2x1
jax: 0.10.0
libtpu: 0.0.40
codegen_flags: <defaults>
</compile_context>

<pallas_src>
import math

import numpy as np

import jax
import jax.numpy as jnp
from jax.experimental import pallas as pl
from jax.experimental.pallas import tpu as pltpu  # noqa: F401  (TPU backend)


# ---------------------------------------------------------------------------
# Fused Pallas kernel: whole conv stack in one invocation, all data in VMEM.
# refs = [x2d, (S, Weff, bias_row) * n_layers, out]
# ---------------------------------------------------------------------------
def _make_fused_kernel(n_layers):
    def kernel(*refs):
        x_ref = refs[0]
        o_ref = refs[-1]

        act = x_ref[...].astype(jnp.float32)          # [B*H, W*C] in VMEM
        ridx = 1
        for _ in range(n_layers):
            s_ref = refs[ridx]          # [kh, B*Hout, B*Hin]   (0/1 selection)
            w_ref = refs[ridx + 1]      # [kh, Win*Cin, Wout*Cout]
            b_ref = refs[ridx + 2]      # [1, Wout*Cout]
            ridx += 3

            kh = s_ref.shape[0]
            rows = s_ref.shape[1]
            cols = w_ref.shape[2]
            acc = jnp.zeros((rows, cols), jnp.float32)
            for ki in range(kh):        # static, unrolled (kh == 3)
                y = jnp.dot(s_ref[ki], act,
                            preferred_element_type=jnp.float32)
                acc = acc + jnp.dot(y, w_ref[ki],
                                    preferred_element_type=jnp.float32)
            act = jnp.maximum(acc + b_ref[...], 0.0)   # bias + ReLU, fused

        o_ref[...] = act.astype(o_ref.dtype)           # [B*Hout, Wout*Cout]
    return kernel


# ---------------------------------------------------------------------------
# Host-side operand construction (tiny, done once per forward).
# ---------------------------------------------------------------------------
def _layer_operands(w, b, stride, padding, batch, h_in, w_in):
    """Build S [kh,B*Ho,B*Hi], Weff [kh,Wi*Ci,Wo*Co], bias_row [1,Wo*Co]."""
    c_out, c_in, kh, kw = w.shape
    h_out = (h_in + 2 * padding - kh) // stride + 1
    w_out = (w_in + 2 * padding - kw) // stride + 1

    # Row-selection matrices (vertical offset + stride + zero padding).
    s = np.zeros((kh, batch * h_out, batch * h_in), np.float32)
    for ki in range(kh):
        for oh in range(h_out):
            src = oh * stride + ki - padding
            if 0 <= src < h_in:
                for bb in range(batch):
                    s[ki, bb * h_out + oh, bb * h_in + src] = 1.0

    # Horizontal 0/1 placement P[kj, w_in, w_out] (offset + stride + padding).
    p = np.zeros((kw, w_in, w_out), np.float32)
    for kj in range(kw):
        for ow in range(w_out):
            src = ow * stride + kj - padding
            if 0 <= src < w_in:
                p[kj, src, ow] = 1.0

    # Weff[ki, a*Cin + c, b*Cout + d] = w[d, c, ki, a - b*stride + padding]
    # (at most one kj contributes per element -> exact in f32).
    w_t = jnp.transpose(w, (2, 3, 1, 0))               # [kh, kw, Cin, Cout]
    weff = jnp.einsum("jab,kjcd->kacbd", jnp.asarray(p), w_t,
                      precision=jax.lax.Precision.HIGHEST)
    weff = weff.reshape(kh, w_in * c_in, w_out * c_out)

    b_row = jnp.tile(b, w_out).reshape(1, w_out * c_out)
    return jnp.asarray(s), weff, b_row, h_out, w_out, c_out


def conv2d_model_forward(x_nchw, params):
    """params: list of (weight [Cout,Cin,kh,kw], bias [Cout], stride, padding)."""
    batch, c_cur, h_cur, w_cur = x_nchw.shape
    # NCHW -> 2-D [B*H, W*C] slab (the only layout op on the way in).
    x2d = jnp.transpose(x_nchw, (0, 2, 3, 1)).reshape(batch * h_cur,
                                                      w_cur * c_cur)

    args = [x2d]
    for (wt, bs, stride, padding) in params:
        s, weff, b_row, h_cur, w_cur, c_cur = _layer_operands(
            wt, bs, stride, padding, batch, h_cur, w_cur)
        args += [s, weff, b_row]

    out2d = pl.pallas_call(
        _make_fused_kernel(len(params)),
        out_shape=jax.ShapeDtypeStruct((batch * h_cur, w_cur * c_cur),
                                       jnp.float32),
        # no grid / no BlockSpecs: single invocation, whole arrays in VMEM
        # (total working set here is < 100 KiB, fits every TPU generation).
    )(*args)

    out = out2d.reshape(batch, h_cur, w_cur, c_cur)
    return jnp.transpose(out, (0, 3, 1, 2))            # -> NCHW


# ---------------------------------------------------------------------------
# Deterministic parameter init (mimics torch.nn.Conv2d default init bounds)
# ---------------------------------------------------------------------------
def init_params(key, in_channels, channels, kernel_sizes):
    ics = [in_channels] + list(channels[:-1])
    shapes = [(oc, ic, k, k) for ic, oc, k in zip(ics, channels, kernel_sizes)]
    weights_biases = []
    for shape in shapes:
        key, kw_, kb_ = jax.random.split(key, 3)
        fan_in = shape[1] * shape[2] * shape[3]
        bound = 1.0 / math.sqrt(fan_in)
        w = jax.random.uniform(kw_, shape, jnp.float32, -bound, bound)
        b = jax.random.uniform(kb_, (shape[0],), jnp.float32, -bound, bound)
        weights_biases.append((w, b))
    return weights_biases


# ---------------------------------------------------------------------------
# Pure-JAX reference for correctness check
# ---------------------------------------------------------------------------
def _reference(x_nchw, params):
    out = x_nchw
    for (w, b, stride, padding) in params:
        out = jax.lax.conv_general_dilated(
            out, w,
            window_strides=(stride, stride),
            padding=[(padding, padding), (padding, padding)],
            dimension_numbers=("NCHW", "OIHW", "NCHW"),
            precision=jax.lax.Precision.HIGHEST,
        )
        out = jnp.maximum(out + b.reshape(1, -1, 1, 1), 0.0)
    return out


if __name__ == "__main__":
    # Module config (use_maxpool=False => strides applied in the conv itself)
    in_channels = 4
    channels = [8, 16]
    kernel_sizes = [3, 3]
    strides = [2, 1]
    paddings = [1, 0]

    key = jax.random.PRNGKey(0)
    key, kx = jax.random.split(key)
    x = jax.random.normal(kx, (2, in_channels, 16, 16), dtype=jnp.float32)

    wbs = init_params(key, in_channels, channels, kernel_sizes)
    params = [(w, b, s, p) for (w, b), s, p in zip(wbs, strides, paddings)]

    out = jax.block_until_ready(conv2d_model_forward(x, params))
    ref = jax.block_until_ready(_reference(x, params))
    assert out.shape == ref.shape, (out.shape, ref.shape)
    assert jnp.allclose(out, ref, atol=1e-4, rtol=1e-4), "mismatch vs reference"

    print("KERNEL_OK")
</pallas_src>

<mosaic_0001>
module attributes {stable_mosaic.version = 11 : i64} {
  func.func @kernel(%arg0: memref<32x64xf32, #tpu.memory_space<vmem>>, %arg1: memref<3x16x32xf32, #tpu.memory_space<vmem>>, %arg2: memref<3x64x64xf32, #tpu.memory_space<vmem>>, %arg3: memref<1x64xf32, #tpu.memory_space<vmem>>, %arg4: memref<3x12x16xf32, #tpu.memory_space<vmem>>, %arg5: memref<3x64x96xf32, #tpu.memory_space<vmem>>, %arg6: memref<1x96xf32, #tpu.memory_space<vmem>>, %arg7: memref<12x96xf32, #tpu.memory_space<vmem>>) attributes {dimension_semantics = [], scalar_prefetch = 0 : i64, scratch_operands = 0 : i64, tpu.core_type = #tpu.core_type<tc>} {
    %c0 = arith.constant 0 : index
    %c0_0 = arith.constant 0 : index
    %0 = vector.load %arg0[%c0, %c0_0] : memref<32x64xf32, #tpu.memory_space<vmem>>, vector<32x64xf32>
    %cst = arith.constant 0.000000e+00 : f32
    %1 = vector.broadcast %cst : f32 to vector<16x64xf32>
    %c0_1 = arith.constant 0 : index
    %c0_2 = arith.constant 0 : index
    %c0_3 = arith.constant 0 : index
    %2 = vector.load %arg1[%c0_1, %c0_2, %c0_3] : memref<3x16x32xf32, #tpu.memory_space<vmem>>, vector<1x16x32xf32>
    %3 = vector.shape_cast %2 : vector<1x16x32xf32> to vector<16x32xf32>
    %cst_4 = arith.constant dense<0.000000e+00> : vector<16x64xf32>
    %4 = tpu.matmul %3, %0, %cst_4 {dimension_numbers = #tpu.dot_dimension_numbers<[1], [0], [0], [1], [0, 0, 1, 1], [], []>} : vector<16x32xf32>, vector<32x64xf32>, vector<16x64xf32> -> vector<16x64xf32>
    %c0_5 = arith.constant 0 : index
    %c0_6 = arith.constant 0 : index
    %c0_7 = arith.constant 0 : index
    %5 = vector.load %arg2[%c0_5, %c0_6, %c0_7] : memref<3x64x64xf32, #tpu.memory_space<vmem>>, vector<1x64x64xf32>
    %6 = vector.shape_cast %5 : vector<1x64x64xf32> to vector<64x64xf32>
    %cst_8 = arith.constant dense<0.000000e+00> : vector<16x64xf32>
    %7 = tpu.matmul %4, %6, %cst_8 {dimension_numbers = #tpu.dot_dimension_numbers<[1], [0], [0], [1], [0, 0, 1, 1], [], []>} : vector<16x64xf32>, vector<64x64xf32>, vector<16x64xf32> -> vector<16x64xf32>
    %8 = arith.addf %1, %7 : vector<16x64xf32>
    %c1 = arith.constant 1 : index
    %c0_9 = arith.constant 0 : index
    %c0_10 = arith.constant 0 : index
    %9 = vector.load %arg1[%c1, %c0_9, %c0_10] : memref<3x16x32xf32, #tpu.memory_space<vmem>>, vector<1x16x32xf32>
    %10 = vector.shape_cast %9 : vector<1x16x32xf32> to vector<16x32xf32>
    %cst_11 = arith.constant dense<0.000000e+00> : vector<16x64xf32>
    %11 = tpu.matmul %10, %0, %cst_11 {dimension_numbers = #tpu.dot_dimension_numbers<[1], [0], [0], [1], [0, 0, 1, 1], [], []>} : vector<16x32xf32>, vector<32x64xf32>, vector<16x64xf32> -> vector<16x64xf32>
    %c1_12 = arith.constant 1 : index
    %c0_13 = arith.constant 0 : index
    %c0_14 = arith.constant 0 : index
    %12 = vector.load %arg2[%c1_12, %c0_13, %c0_14] : memref<3x64x64xf32, #tpu.memory_space<vmem>>, vector<1x64x64xf32>
    %13 = vector.shape_cast %12 : vector<1x64x64xf32> to vector<64x64xf32>
    %cst_15 = arith.constant dense<0.000000e+00> : vector<16x64xf32>
    %14 = tpu.matmul %11, %13, %cst_15 {dimension_numbers = #tpu.dot_dimension_numbers<[1], [0], [0], [1], [0, 0, 1, 1], [], []>} : vector<16x64xf32>, vector<64x64xf32>, vector<16x64xf32> -> vector<16x64xf32>
    %15 = arith.addf %8, %14 : vector<16x64xf32>
    %c2 = arith.constant 2 : index
    %c0_16 = arith.constant 0 : index
    %c0_17 = arith.constant 0 : index
    %16 = vector.load %arg1[%c2, %c0_16, %c0_17] : memref<3x16x32xf32, #tpu.memory_space<vmem>>, vector<1x16x32xf32>
    %17 = vector.shape_cast %16 : vector<1x16x32xf32> to vector<16x32xf32>
    %cst_18 = arith.constant dense<0.000000e+00> : vector<16x64xf32>
    %18 = tpu.matmul %17, %0, %cst_18 {dimension_numbers = #tpu.dot_dimension_numbers<[1], [0], [0], [1], [0, 0, 1, 1], [], []>} : vector<16x32xf32>, vector<32x64xf32>, vector<16x64xf32> -> vector<16x64xf32>
    %c2_19 = arith.constant 2 : index
    %c0_20 = arith.constant 0 : index
    %c0_21 = arith.constant 0 : index
    %19 = vector.load %arg2[%c2_19, %c0_20, %c0_21] : memref<3x64x64xf32, #tpu.memory_space<vmem>>, vector<1x64x64xf32>
    %20 = vector.shape_cast %19 : vector<1x64x64xf32> to vector<64x64xf32>
    %cst_22 = arith.constant dense<0.000000e+00> : vector<16x64xf32>
    %21 = tpu.matmul %18, %20, %cst_22 {dimension_numbers = #tpu.dot_dimension_numbers<[1], [0], [0], [1], [0, 0, 1, 1], [], []>} : vector<16x64xf32>, vector<64x64xf32>, vector<16x64xf32> -> vector<16x64xf32>
    %22 = arith.addf %15, %21 : vector<16x64xf32>
    %c0_23 = arith.constant 0 : index
    %c0_24 = arith.constant 0 : index
    %23 = vector.load %arg3[%c0_23, %c0_24] : memref<1x64xf32, #tpu.memory_space<vmem>>, vector<1x64xf32>
    %24 = vector.broadcast %23 : vector<1x64xf32> to vector<16x64xf32>
    %25 = arith.addf %22, %24 : vector<16x64xf32>
    %cst_25 = arith.constant 0.000000e+00 : f32
    %26 = vector.broadcast %cst_25 : f32 to vector<16x64xf32>
    %27 = arith.maximumf %25, %26 : vector<16x64xf32>
    %cst_26 = arith.constant 0.000000e+00 : f32
    %28 = vector.broadcast %cst_26 : f32 to vector<12x96xf32>
    %c0_27 = arith.constant 0 : index
    %c0_28 = arith.constant 0 : index
    %c0_29 = arith.constant 0 : index
    %29 = vector.load %arg4[%c0_27, %c0_28, %c0_29] : memref<3x12x16xf32, #tpu.memory_space<vmem>>, vector<1x12x16xf32>
    %30 = vector.shape_cast %29 : vector<1x12x16xf32> to vector<12x16xf32>
    %cst_30 = arith.constant dense<0.000000e+00> : vector<12x64xf32>
    %31 = tpu.matmul %30, %27, %cst_30 {dimension_numbers = #tpu.dot_dimension_numbers<[1], [0], [0], [1], [0, 0, 1, 1], [], []>} : vector<12x16xf32>, vector<16x64xf32>, vector<12x64xf32> -> vector<12x64xf32>
    %c0_31 = arith.constant 0 : index
    %c0_32 = arith.constant 0 : index
    %c0_33 = arith.constant 0 : index
    %32 = vector.load %arg5[%c0_31, %c0_32, %c0_33] : memref<3x64x96xf32, #tpu.memory_space<vmem>>, vector<1x64x96xf32>
    %33 = vector.shape_cast %32 : vector<1x64x96xf32> to vector<64x96xf32>
    %cst_34 = arith.constant dense<0.000000e+00> : vector<12x96xf32>
    %34 = tpu.matmul %31, %33, %cst_34 {dimension_numbers = #tpu.dot_dimension_numbers<[1], [0], [0], [1], [0, 0, 1, 1], [], []>} : vector<12x64xf32>, vector<64x96xf32>, vector<12x96xf32> -> vector<12x96xf32>
    %35 = arith.addf %28, %34 : vector<12x96xf32>
    %c1_35 = arith.constant 1 : index
    %c0_36 = arith.constant 0 : index
    %c0_37 = arith.constant 0 : index
    %36 = vector.load %arg4[%c1_35, %c0_36, %c0_37] : memref<3x12x16xf32, #tpu.memory_space<vmem>>, vector<1x12x16xf32>
    %37 = vector.shape_cast %36 : vector<1x12x16xf32> to vector<12x16xf32>
    %cst_38 = arith.constant dense<0.000000e+00> : vector<12x64xf32>
    %38 = tpu.matmul %37, %27, %cst_38 {dimension_numbers = #tpu.dot_dimension_numbers<[1], [0], [0], [1], [0, 0, 1, 1], [], []>} : vector<12x16xf32>, vector<16x64xf32>, vector<12x64xf32> -> vector<12x64xf32>
    %c1_39 = arith.constant 1 : index
    %c0_40 = arith.constant 0 : index
    %c0_41 = arith.constant 0 : index
    %39 = vector.load %arg5[%c1_39, %c0_40, %c0_41] : memref<3x64x96xf32, #tpu.memory_space<vmem>>, vector<1x64x96xf32>
    %40 = vector.shape_cast %39 : vector<1x64x96xf32> to vector<64x96xf32>
    %cst_42 = arith.constant dense<0.000000e+00> : vector<12x96xf32>
    %41 = tpu.matmul %38, %40, %cst_42 {dimension_numbers = #tpu.dot_dimension_numbers<[1], [0], [0], [1], [0, 0, 1, 1], [], []>} : vector<12x64xf32>, vector<64x96xf32>, vector<12x96xf32> -> vector<12x96xf32>
    %42 = arith.addf %35, %41 : vector<12x96xf32>
    %c2_43 = arith.constant 2 : index
    %c0_44 = arith.constant 0 : index
    %c0_45 = arith.constant 0 : index
    %43 = vector.load %arg4[%c2_43, %c0_44, %c0_45] : memref<3x12x16xf32, #tpu.memory_space<vmem>>, vector<1x12x16xf32>
    %44 = vector.shape_cast %43 : vector<1x12x16xf32> to vector<12x16xf32>
    %cst_46 = arith.constant dense<0.000000e+00> : vector<12x64xf32>
    %45 = tpu.matmul %44, %27, %cst_46 {dimension_numbers = #tpu.dot_dimension_numbers<[1], [0], [0], [1], [0, 0, 1, 1], [], []>} : vector<12x16xf32>, vector<16x64xf32>, vector<12x64xf32> -> vector<12x64xf32>
    %c2_47 = arith.constant 2 : index
    %c0_48 = arith.constant 0 : index
    %c0_49 = arith.constant 0 : index
    %46 = vector.load %arg5[%c2_47, %c0_48, %c0_49] : memref<3x64x96xf32, #tpu.memory_space<vmem>>, vector<1x64x96xf32>
    %47 = vector.shape_cast %46 : vector<1x64x96xf32> to vector<64x96xf32>
    %cst_50 = arith.constant dense<0.000000e+00> : vector<12x96xf32>
    %48 = tpu.matmul %45, %47, %cst_50 {dimension_numbers = #tpu.dot_dimension_numbers<[1], [0], [0], [1], [0, 0, 1, 1], [], []>} : vector<12x64xf32>, vector<64x96xf32>, vector<12x96xf32> -> vector<12x96xf32>
    %49 = arith.addf %42, %48 : vector<12x96xf32>
    %c0_51 = arith.constant 0 : index
    %c0_52 = arith.constant 0 : index
    %50 = vector.load %arg6[%c0_51, %c0_52] : memref<1x96xf32, #tpu.memory_space<vmem>>, vector<1x96xf32>
    %51 = vector.broadcast %50 : vector<1x96xf32> to vector<12x96xf32>
    %52 = arith.addf %49, %51 : vector<12x96xf32>
    %cst_53 = arith.constant 0.000000e+00 : f32
    %53 = vector.broadcast %cst_53 : f32 to vector<12x96xf32>
    %54 = arith.maximumf %52, %53 : vector<12x96xf32>
    %c0_54 = arith.constant 0 : index
    %c0_55 = arith.constant 0 : index
    %55 = vector.load %arg7[%c0_54, %c0_55] : memref<12x96xf32, #tpu.memory_space<vmem>>, vector<12x96xf32>
    tpu.vector_store %arg7[%c0_54, %c0_55], %54 {strides = array<i32>} : memref<12x96xf32, #tpu.memory_space<vmem>>, vector<12x96xf32>,
    return
  }
}

</mosaic_0001>

<llo_original>
// kernel: tpu_custom_call.1
$region0: #{tpu_custom_call.1}
  #allocation0 [shape = 'u32[]', space=smem, size = 0x4, offset = 0x4, fixed_abs, tag = 'smem constant byte address 0x4 - core index']
  #allocation1 [shape = 'u32[144,128]{1,0:T(1,128)}', space=vmem, size = 0x12000, scoped, tag = 'internal scratch']
  %s0 = inlined_call_operand.hbm [shape: f32[32,64], index: 0, kind: input, shape index: {}]
  %s1 = inlined_call_operand.hbm [shape: f32[3,16,32], index: 1, kind: input, shape index: {}]
  %s2 = inlined_call_operand.hbm [shape: f32[3,64,64], index: 2, kind: input, shape index: {}]
  %s3 = inlined_call_operand.vmem [shape: f32[1,64], index: 3, kind: input, shape index: {}]
  %s4 = inlined_call_operand.hbm [shape: f32[3,12,16], index: 4, kind: input, shape index: {}]
  %s5 = inlined_call_operand.hbm [shape: f32[3,64,96], index: 5, kind: input, shape index: {}]
  %s6 = inlined_call_operand.vmem [shape: f32[1,96], index: 6, kind: input, shape index: {}]
  %s7 = inlined_call_operand.hbm [shape: f32[12,96], index: 7, kind: output, shape index: {}]
  %s8 = sld [smem:[#allocation0]]
  $region58: #{tpu_custom_call.1} parent=0
    _
  %s10 = ssub.s32 1, %s8
  %s11 = scalar_select 0, %s10, %s8
  $region1: #{tpu_custom_call.1} parent=0
    #allocation2 [shape = 'u8[16384]{0}', space=vmem, size = 0x4000, scoped, tag = 'input window, operand 0, single buffered']
    #allocation3 [shape = 's32[1]{0}', space=sflag, size = 0x4, scoped, tag = 'scoped memory for tpu_custom_call.1']
    #allocation4 [shape = 's32[1]{0}', space=sflag, size = 0x4, scoped, tag = 'scoped memory for tpu_custom_call.1']
    #allocation5 [shape = 'u8[24576]{0}', space=vmem, size = 0x6000, scoped, tag = 'input window, operand 1, single buffered']
    #allocation6 [shape = 's32[1]{0}', space=sflag, size = 0x4, scoped, tag = 'scoped memory for tpu_custom_call.1']
    #allocation7 [shape = 'u8[98304]{0}', space=vmem, size = 0x18000, scoped, tag = 'input window, operand 2, single buffered']
    #allocation8 [shape = 'u8[24576]{0}', space=vmem, size = 0x6000, scoped, tag = 'input window, operand 4, single buffered']
    #allocation9 [shape = 's32[1]{0}', space=sflag, size = 0x4, scoped, tag = 'scoped memory for tpu_custom_call.1']
    #allocation10 [shape = 'u8[98304]{0}', space=vmem, size = 0x18000, scoped, tag = 'input window, operand 5, single buffered']
    #allocation11 [shape = 'u8[8192]{0}', space=vmem, size = 0x2000, scoped, tag = 'output window, operand 0, single buffered']
    %12 = vsyncpa [#allocation3], 0
    %13 = vsyncpa [#allocation6], 0
    %14 = vsyncpa [#allocation9], 0
    %15 = vsyncpa [#allocation4], 0
    // Predicated region
    $region2: #{tpu_custom_call.1} parent=1 // pred_check
      _
    $region3: #{tpu_custom_call.1} parent=1 // pred_check_branch
      %17 = sbr.rel (0) target = $region5
    $region4: #{tpu_custom_call.1} parent=1 // pred_region
      %s19 = ssub.s32 512, 512
      %20 = vsyncadd [#allocation3], %s19
      %s21 = sshll.u32 [#allocation2], 4
      %s22 = int_to_ptr.vmem [resolvable:$true] %s21
      %27 = dma.hbm_to_vmem [thread:$0]  %s0, 512, %s22, [#allocation3], 128, 128, 8
    $region5: #{tpu_custom_call.1} parent=1 // pred_fallthru
      _
    // Predicated region
    $region6: #{tpu_custom_call.1} parent=1 // pred_check
      _
    $region7: #{tpu_custom_call.1} parent=1 // pred_check_branch
      %29 = sbr.rel (0) target = $region9
    $region8: #{tpu_custom_call.1} parent=1 // pred_region
      %s31 = ssub.s32 768, 768
      %32 = vsyncadd [#allocation6], %s31
      %s33 = sshll.u32 [#allocation5], 4
      %s34 = int_to_ptr.vmem [resolvable:$true] %s33
      %39 = dma.hbm_to_vmem [thread:$0]  %s1, 768, %s34, [#allocation6], 128, 128, 8
    $region9: #{tpu_custom_call.1} parent=1 // pred_fallthru
      _
    // Predicated region
    $region10: #{tpu_custom_call.1} parent=1 // pred_check
      _
    $region11: #{tpu_custom_call.1} parent=1 // pred_check_branch
      %41 = sbr.rel (0) target = $region13
    $region12: #{tpu_custom_call.1} parent=1 // pred_region
      %s43 = ssub.s32 3072, 3072
      %44 = vsyncadd [#allocation6], %s43
      %s45 = sshll.u32 [#allocation7], 4
      %s46 = int_to_ptr.vmem [resolvable:$true] %s45
      %51 = dma.hbm_to_vmem [thread:$0]  %s2, 3072, %s46, [#allocation6], 128, 128, 8
    $region13: #{tpu_custom_call.1} parent=1 // pred_fallthru
      _
    // Predicated region
    $region14: #{tpu_custom_call.1} parent=1 // pred_check
      _
    $region15: #{tpu_custom_call.1} parent=1 // pred_check_branch
      %53 = sbr.rel (0) target = $region17
    $region16: #{tpu_custom_call.1} parent=1 // pred_region
      _
    $region17: #{tpu_custom_call.1} parent=1 // pred_fallthru
      _
    // Predicated region
    $region18: #{tpu_custom_call.1} parent=1 // pred_check
      _
    $region19: #{tpu_custom_call.1} parent=1 // pred_check_branch
      %55 = sbr.rel (0) target = $region21
    $region20: #{tpu_custom_call.1} parent=1 // pred_region
      %s57 = ssub.s32 768, 768
      %58 = vsyncadd [#allocation9], %s57
      %s59 = sshll.u32 [#allocation8], 4
      %s60 = int_to_ptr.vmem [resolvable:$true] %s59
      %65 = dma.hbm_to_vmem [thread:$0]  %s4, 768, %s60, [#allocation9], 128, 128, 8
    $region21: #{tpu_custom_call.1} parent=1 // pred_fallthru
      _
    // Predicated region
    $region22: #{tpu_custom_call.1} parent=1 // pred_check
      _
    $region23: #{tpu_custom_call.1} parent=1 // pred_check_branch
      %67 = sbr.rel (0) target = $region25
    $region24: #{tpu_custom_call.1} parent=1 // pred_region
      %s69 = ssub.s32 3072, 3072
      %70 = vsyncadd [#allocation9], %s69
      %s71 = sshll.u32 [#allocation10], 4
      %s72 = int_to_ptr.vmem [resolvable:$true] %s71
      %77 = dma.hbm_to_vmem [thread:$0]  %s5, 3072, %s72, [#allocation9], 128, 128, 8
    $region25: #{tpu_custom_call.1} parent=1 // pred_fallthru
      _
    // Predicated region
    $region26: #{tpu_custom_call.1} parent=1 // pred_check
      _
    $region27: #{tpu_custom_call.1} parent=1 // pred_check_branch
      %79 = sbr.rel (0) target = $region29
    $region28: #{tpu_custom_call.1} parent=1 // pred_region
      _
    $region29: #{tpu_custom_call.1} parent=1 // pred_fallthru
      _
    // Predicated region
    $region30: #{tpu_custom_call.1} parent=1 // pred_check
      _
    $region31: #{tpu_custom_call.1} parent=1 // pred_check_branch
      %81 = sbr.rel (0) target = $region33
    $region32: #{tpu_custom_call.1} parent=1 // pred_region
      %82 = dma.done [#allocation3], 512
    $region33: #{tpu_custom_call.1} parent=1 // pred_fallthru
      _
    // Predicated region
    $region34: #{tpu_custom_call.1} parent=1 // pred_check
      _
    $region35: #{tpu_custom_call.1} parent=1 // pred_check_branch
      %84 = sbr.rel (0) target = $region37
    $region36: #{tpu_custom_call.1} parent=1 // pred_region
      %85 = dma.done [#allocation6], 768
    $region37: #{tpu_custom_call.1} parent=1 // pred_fallthru
      _
    // Predicated region
    $region38: #{tpu_custom_call.1} parent=1 // pred_check
      _
    $region39: #{tpu_custom_call.1} parent=1 // pred_check_branch
      %87 = sbr.rel (0) target = $region41
    $region40: #{tpu_custom_call.1} parent=1 // pred_region
      %88 = dma.done [#allocation6], 3072
    $region41: #{tpu_custom_call.1} parent=1 // pred_fallthru
      _
    // Predicated region
    $region42: #{tpu_custom_call.1} parent=1 // pred_check
      _
    $region43: #{tpu_custom_call.1} parent=1 // pred_check_branch
      %90 = sbr.rel (0) target = $region45
    $region44: #{tpu_custom_call.1} parent=1 // pred_region
      %91 = dma.done [#allocation9], 768
    $region45: #{tpu_custom_call.1} parent=1 // pred_fallthru
      _
    // Predicated region
    $region46: #{tpu_custom_call.1} parent=1 // pred_check
      _
    $region47: #{tpu_custom_call.1} parent=1 // pred_check_branch
      %93 = sbr.rel (0) target = $region49
    $region48: #{tpu_custom_call.1} parent=1 // pred_region
      %94 = dma.done [#allocation9], 3072
    $region49: #{tpu_custom_call.1} parent=1 // pred_fallthru
      _
    %v95 = vld [vmem:[#allocation2] sm:$0xff]
    %v96 = vld [vmem:[#allocation2 + $0x8] sm:$0xff]
    %v97 = vld [vmem:[#allocation2 + $0x10] sm:$0xff]
    %v98 = vld [vmem:[#allocation2 + $0x18] sm:$0xff]
    %v99 = vld [vmem:[#allocation5] sm:$0xff]
    %v100 = vld [vmem:[#allocation5 + $0x8] sm:$0xff]
    %vm101 = vcmask 261120
    %v103 = vsel %vm101, %v99, 0
    %v106 = vsel %vm101, %v100, 0
    %108 = vmatprep.subr.mxu0 0.0
    %109 = vmatpush1.msra.mxu0 %v95
    %110 = vmatprep.subr.mxu0 0.0
    %111 = vmatpush1.msra.mxu0 %v96
    %112 = vmatprep.subr.mxu0 0.0
    %113 = vmatpush1.msra.mxu0 %v97
    %114 = vmatprep.subr.mxu0 0.0
    %115 = vmatpush1.msra.mxu0 %v98
    %116 = vmatprep.subr.mxu0 0.0
    %117 = vmatpush1.msra.mxu0 0.0
    %118 = vmatprep.subr.mxu0 0.0
    %119 = vmatpush1.msra.mxu0 0.0
    %120 = vmatprep.subr.mxu0 0.0
    %121 = vmatpush1.msra.mxu0 0.0
    %122 = vmatprep.subr.mxu0 0.0
    %123 = vmatpush1.msra.mxu0 0.0
    %124 = vmatprep.subr.mxu0 0.0
    %125 = vmatpush1.msra.mxu0 0.0
    %126 = vmatprep.subr.mxu0 0.0
    %127 = vmatpush1.msra.mxu0 0.0
    %128 = vmatprep.subr.mxu0 0.0
    %129 = vmatpush1.msra.mxu0 0.0
    %130 = vmatprep.subr.mxu0 0.0
    %131 = vmatpush1.msra.mxu0 0.0
    %132 = vmatprep.subr.mxu0 0.0
    %133 = vmatpush1.msra.mxu0 0.0
    %134 = vmatprep.subr.mxu0 0.0
    %135 = vmatpush1.msra.mxu0 0.0
    %136 = vmatprep.subr.mxu0 0.0
    %137 = vmatpush1.msra.mxu0 0.0
    %138 = vmatprep.subr.mxu0 0.0
    %139 = vmatpush1.msra.mxu0 0.0
    %140 = vmatprep.subr.mxu0 0.0
    %141 = vmatpush1.msra.mxu0 0.0
    %142 = vmatprep.subr.mxu0 0.0
    %143 = vmatpush1.msra.mxu0 0.0
    %144 = vmatprep.subr.mxu0 0.0
    %145 = vmatpush1.msra.mxu0 0.0
    %146 = vmatprep.subr.mxu0 0.0
    %147 = vmatpush1.msra.mxu0 0.0
    %148 = vmatprep.subr.mxu0 0.0
    %149 = vmatpush1.msra.mxu0 0.0
    %150 = vmatprep.subr.mxu0 0.0
    %151 = vmatpush1.msra.mxu0 0.0
    %152 = vmatprep.subr.mxu0 0.0
    %153 = vmatpush1.msra.mxu0 0.0
    %154 = vmatprep.subr.mxu0 0.0
    %155 = vmatpush1.msra.mxu0 0.0
    %156 = vmatprep.subr.mxu0 0.0
    %157 = vmatpush1.msra.mxu0 0.0
    %158 = vmatprep.subr.mxu0 0.0
    %159 = vmatpush1.msra.mxu0 0.0
    %160 = vmatprep.subr.mxu0 0.0
    %161 = vmatpush1.msra.mxu0 0.0
    %162 = vmatprep.subr.mxu0 0.0
    %163 = vmatpush1.msra.mxu0 0.0
    %164 = vmatprep.subr.mxu0 0.0
    %165 = vmatpush1.msra.mxu0 0.0
    %166 = vmatprep.subr.mxu0 0.0
    %167 = vmatpush1.msra.mxu0 0.0
    %168 = vmatprep.subr.mxu0 0.0
    %169 = vmatpush1.msra.mxu0 0.0
    %170 = vmatprep.subr.mxu0 0.0
    %171 = vmatpush1.msra.mxu0 0.0
    %172 = vmatprep.mubr.f32.mxu0 0.0
    %173 = vmatmul.mubr.f32.gmra.mrb[0].mxu0 %v103
    %v174 = vpop.f32.mrb[0].mxu0
    %v175 = vadd.f32 0.0, %v174
    %v176 = vpop.f32.mrb[0].mxu0
    %177 = vmatprep.mubr.f32.mxu0 0.0
    %178 = vmatmul.mubr.f32.gmra.mrb[0].mxu0 %v106
    %v179 = vpop.f32.mrb[0].mxu0
    %v180 = vadd.f32 0.0, %v179
    %v181 = vpop.f32.mrb[0].mxu0
    %182 = vdwg.mxu0
    %v183 = vld [vmem:[#allocation7] sm:$0xff]
    %v184 = vld [vmem:[#allocation7 + $0x8] sm:$0xff]
    %v185 = vld [vmem:[#allocation7 + $0x10] sm:$0xff]
    %v186 = vld [vmem:[#allocation7 + $0x18] sm:$0xff]
    %v187 = vld [vmem:[#allocation7 + $0x20] sm:$0xff]
    %v188 = vld [vmem:[#allocation7 + $0x28] sm:$0xff]
    %v189 = vld [vmem:[#allocation7 + $0x30] sm:$0xff]
    %v190 = vld [vmem:[#allocation7 + $0x38] sm:$0xff]
    %s191 = scalar_lea.vmem [#allocation5], 16
    %v192 = vld [vmem:[%s191] sm:$0xff]
    %v193 = vld [vmem:[%s191 + $0x8] sm:$0xff]
    %v195 = vsel %vm101, %v192, 0
    %v198 = vsel %vm101, %v193, 0
    %200 = vmatprep.subr.mxu0 0.0
    %201 = vmatpush1.msra.mxu0 %v95
    %202 = vmatprep.subr.mxu0 0.0
    %203 = vmatpush1.msra.mxu0 %v96
    %204 = vmatprep.subr.mxu0 0.0
    %205 = vmatpush1.msra.mxu0 %v97
    %206 = vmatprep.subr.mxu0 0.0
    %207 = vmatpush1.msra.mxu0 %v98
    %208 = vmatprep.subr.mxu0 0.0
    %209 = vmatpush1.msra.mxu0 0.0
    %210 = vmatprep.subr.mxu0 0.0
    %211 = vmatpush1.msra.mxu0 0.0
    %212 = vmatprep.subr.mxu0 0.0
    %213 = vmatpush1.msra.mxu0 0.0
    %214 = vmatprep.subr.mxu0 0.0
    %215 = vmatpush1.msra.mxu0 0.0
    %216 = vmatprep.subr.mxu0 0.0
    %217 = vmatpush1.msra.mxu0 0.0
    %218 = vmatprep.subr.mxu0 0.0
    %219 = vmatpush1.msra.mxu0 0.0
    %220 = vmatprep.subr.mxu0 0.0
    %221 = vmatpush1.msra.mxu0 0.0
    %222 = vmatprep.subr.mxu0 0.0
    %223 = vmatpush1.msra.mxu0 0.0
    %224 = vmatprep.subr.mxu0 0.0
    %225 = vmatpush1.msra.mxu0 0.0
    %226 = vmatprep.subr.mxu0 0.0
    %227 = vmatpush1.msra.mxu0 0.0
    %228 = vmatprep.subr.mxu0 0.0
    %229 = vmatpush1.msra.mxu0 0.0
    %230 = vmatprep.subr.mxu0 0.0
    %231 = vmatpush1.msra.mxu0 0.0
    %232 = vmatprep.subr.mxu0 0.0
    %233 = vmatpush1.msra.mxu0 0.0
    %234 = vmatprep.subr.mxu0 0.0
    %235 = vmatpush1.msra.mxu0 0.0
    %236 = vmatprep.subr.mxu0 0.0
    %237 = vmatpush1.msra.mxu0 0.0
    %238 = vmatprep.subr.mxu0 0.0
    %239 = vmatpush1.msra.mxu0 0.0
    %240 = vmatprep.subr.mxu0 0.0
    %241 = vmatpush1.msra.mxu0 0.0
    %242 = vmatprep.subr.mxu0 0.0
    %243 = vmatpush1.msra.mxu0 0.0
    %244 = vmatprep.subr.mxu0 0.0
    %245 = vmatpush1.msra.mxu0 0.0
    %246 = vmatprep.subr.mxu0 0.0
    %247 = vmatpush1.msra.mxu0 0.0
    %248 = vmatprep.subr.mxu0 0.0
    %249 = vmatpush1.msra.mxu0 0.0
    %250 = vmatprep.subr.mxu0 0.0
    %251 = vmatpush1.msra.mxu0 0.0
    %252 = vmatprep.subr.mxu0 0.0
    %253 = vmatpush1.msra.mxu0 0.0
    %254 = vmatprep.subr.mxu0 0.0
    %255 = vmatpush1.msra.mxu0 0.0
    %256 = vmatprep.subr.mxu0 0.0
    %257 = vmatpush1.msra.mxu0 0.0
    %258 = vmatprep.subr.mxu0 0.0
    %259 = vmatpush1.msra.mxu0 0.0
    %260 = vmatprep.subr.mxu0 0.0
    %261 = vmatpush1.msra.mxu0 0.0
    %262 = vmatprep.subr.mxu0 0.0
    %263 = vmatpush1.msra.mxu0 0.0
    %264 = vmatprep.mubr.f32.mxu0 0.0
    %265 = vmatmul.mubr.f32.gmra.mrb[0].mxu0 %v195
    %v266 = vpop.f32.mrb[0].mxu0
    %v267 = vadd.f32 0.0, %v266
    %v268 = vpop.f32.mrb[0].mxu0
    %269 = vmatprep.mubr.f32.mxu0 0.0
    %270 = vmatmul.mubr.f32.gmra.mrb[0].mxu0 %v198
    %v271 = vpop.f32.mrb[0].mxu0
    %v272 = vadd.f32 0.0, %v271
    %v273 = vpop.f32.mrb[0].mxu0
    %274 = vdwg.mxu0
    %s275 = scalar_lea.vmem [#allocation7], 64
    %v276 = vld [vmem:[%s275] sm:$0xff]
    %v277 = vld [vmem:[%s275 + $0x8] sm:$0xff]
    %v278 = vld [vmem:[%s275 + $0x10] sm:$0xff]
    %v279 = vld [vmem:[%s275 + $0x18] sm:$0xff]
    %v280 = vld [vmem:[%s275 + $0x20] sm:$0xff]
    %v281 = vld [vmem:[%s275 + $0x28] sm:$0xff]
    %v282 = vld [vmem:[%s275 + $0x30] sm:$0xff]
    %v283 = vld [vmem:[%s275 + $0x38] sm:$0xff]
    %vm284 = vcmask 523264
    %v286 = vsel %vm284, %v267, 0
    %v289 = vsel %vm284, %v272, 0
    %291 = vmatprep.subr.mxu0 0.0
    %292 = vmatpush1.msra.mxu0 %v276
    %293 = vmatprep.subr.mxu0 0.0
    %294 = vmatpush1.msra.mxu0 %v277
    %295 = vmatprep.subr.mxu0 0.0
    %296 = vmatpush1.msra.mxu0 %v278
    %297 = vmatprep.subr.mxu0 0.0
    %298 = vmatpush1.msra.mxu0 %v279
    %299 = vmatprep.subr.mxu0 0.0
    %300 = vmatpush1.msra.mxu0 %v280
    %301 = vmatprep.subr.mxu0 0.0
    %302 = vmatpush1.msra.mxu0 %v281
    %303 = vmatprep.subr.mxu0 0.0
    %304 = vmatpush1.msra.mxu0 %v282
    %305 = vmatprep.subr.mxu0 0.0
    %306 = vmatpush1.msra.mxu0 %v283
    %307 = vmatprep.subr.mxu0 0.0
    %308 = vmatpush1.msra.mxu0 0.0
    %309 = vmatprep.subr.mxu0 0.0
    %310 = vmatpush1.msra.mxu0 0.0
    %311 = vmatprep.subr.mxu0 0.0
    %312 = vmatpush1.msra.mxu0 0.0
    %313 = vmatprep.subr.mxu0 0.0
    %314 = vmatpush1.msra.mxu0 0.0
    %315 = vmatprep.subr.mxu0 0.0
    %316 = vmatpush1.msra.mxu0 0.0
    %317 = vmatprep.subr.mxu0 0.0
    %318 = vmatpush1.msra.mxu0 0.0
    %319 = vmatprep.subr.mxu0 0.0
    %320 = vmatpush1.msra.mxu0 0.0
    %321 = vmatprep.subr.mxu0 0.0
    %322 = vmatpush1.msra.mxu0 0.0
    %323 = vmatprep.subr.mxu0 0.0
    %324 = vmatpush1.msra.mxu0 0.0
    %325 = vmatprep.subr.mxu0 0.0
    %326 = vmatpush1.msra.mxu0 0.0
    %327 = vmatprep.subr.mxu0 0.0
    %328 = vmatpush1.msra.mxu0 0.0
    %329 = vmatprep.subr.mxu0 0.0
    %330 = vmatpush1.msra.mxu0 0.0
    %331 = vmatprep.subr.mxu0 0.0
    %332 = vmatpush1.msra.mxu0 0.0
    %333 = vmatprep.subr.mxu0 0.0
    %334 = vmatpush1.msra.mxu0 0.0
    %335 = vmatprep.subr.mxu0 0.0
    %336 = vmatpush1.msra.mxu0 0.0
    %337 = vmatprep.subr.mxu0 0.0
    %338 = vmatpush1.msra.mxu0 0.0
    %339 = vmatprep.subr.mxu0 0.0
    %340 = vmatpush1.msra.mxu0 0.0
    %341 = vmatprep.subr.mxu0 0.0
    %342 = vmatpush1.msra.mxu0 0.0
    %343 = vmatprep.subr.mxu0 0.0
    %344 = vmatpush1.msra.mxu0 0.0
    %345 = vmatprep.subr.mxu0 0.0
    %346 = vmatpush1.msra.mxu0 0.0
    %347 = vmatprep.subr.mxu0 0.0
    %348 = vmatpush1.msra.mxu0 0.0
    %349 = vmatprep.subr.mxu0 0.0
    %350 = vmatpush1.msra.mxu0 0.0
    %351 = vmatprep.subr.mxu0 0.0
    %352 = vmatpush1.msra.mxu0 0.0
    %353 = vmatprep.subr.mxu0 0.0
    %354 = vmatpush1.msra.mxu0 0.0
    %355 = vmatprep.mubr.f32.mxu0 0.0
    %356 = vmatmul.mubr.f32.gmra.mrb[0].mxu0 %v286
    %v357 = vpop.f32.mrb[0].mxu0
    %v358 = vadd.f32 0.0, %v357
    %v359 = vpop.f32.mrb[0].mxu0
    %360 = vmatprep.mubr.f32.mxu0 0.0
    %361 = vmatmul.mubr.f32.gmra.mrb[0].mxu0 %v289
    %v362 = vpop.f32.mrb[0].mxu0
    %v363 = vadd.f32 0.0, %v362
    %v364 = vpop.f32.mrb[0].mxu0
    %365 = vdwg.mxu0
    %v367 = vsel %vm284, %v175, 0
    %v370 = vsel %vm284, %v180, 0
    %372 = vmatprep.subr.mxu0 0.0
    %373 = vmatpush1.msra.mxu0 %v183
    %374 = vmatprep.subr.mxu0 0.0
    %375 = vmatpush1.msra.mxu0 %v184
    %376 = vmatprep.subr.mxu0 0.0
    %377 = vmatpush1.msra.mxu0 %v185
    %378 = vmatprep.subr.mxu0 0.0
    %379 = vmatpush1.msra.mxu0 %v186
    %380 = vmatprep.subr.mxu0 0.0
    %381 = vmatpush1.msra.mxu0 %v187
    %382 = vmatprep.subr.mxu0 0.0
    %383 = vmatpush1.msra.mxu0 %v188
    %384 = vmatprep.subr.mxu0 0.0
    %385 = vmatpush1.msra.mxu0 %v189
    %386 = vmatprep.subr.mxu0 0.0
    %387 = vmatpush1.msra.mxu0 %v190
    %388 = vmatprep.subr.mxu0 0.0
    %389 = vmatpush1.msra.mxu0 0.0
    %390 = vmatprep.subr.mxu0 0.0
    %391 = vmatpush1.msra.mxu0 0.0
    %392 = vmatprep.subr.mxu0 0.0
    %393 = vmatpush1.msra.mxu0 0.0
    %394 = vmatprep.subr.mxu0 0.0
    %395 = vmatpush1.msra.mxu0 0.0
    %396 = vmatprep.subr.mxu0 0.0
    %397 = vmatpush1.msra.mxu0 0.0
    %398 = vmatprep.subr.mxu0 0.0
    %399 = vmatpush1.msra.mxu0 0.0
    %400 = vmatprep.subr.mxu0 0.0
    %401 = vmatpush1.msra.mxu0 0.0
    %402 = vmatprep.subr.mxu0 0.0
    %403 = vmatpush1.msra.mxu0 0.0
    %404 = vmatprep.subr.mxu0 0.0
    %405 = vmatpush1.msra.mxu0 0.0
    %406 = vmatprep.subr.mxu0 0.0
    %407 = vmatpush1.msra.mxu0 0.0
    %408 = vmatprep.subr.mxu0 0.0
    %409 = vmatpush1.msra.mxu0 0.0
    %410 = vmatprep.subr.mxu0 0.0
    %411 = vmatpush1.msra.mxu0 0.0
    %412 = vmatprep.subr.mxu0 0.0
    %413 = vmatpush1.msra.mxu0 0.0
    %414 = vmatprep.subr.mxu0 0.0
    %415 = vmatpush1.msra.mxu0 0.0
    %416 = vmatprep.subr.mxu0 0.0
    %417 = vmatpush1.msra.mxu0 0.0
    %418 = vmatprep.subr.mxu0 0.0
    %419 = vmatpush1.msra.mxu0 0.0
    %420 = vmatprep.subr.mxu0 0.0
    %421 = vmatpush1.msra.mxu0 0.0
    %422 = vmatprep.subr.mxu0 0.0
    %423 = vmatpush1.msra.mxu0 0.0
    %424 = vmatprep.subr.mxu0 0.0
    %425 = vmatpush1.msra.mxu0 0.0
    %426 = vmatprep.subr.mxu0 0.0
    %427 = vmatpush1.msra.mxu0 0.0
    %428 = vmatprep.subr.mxu0 0.0
    %429 = vmatpush1.msra.mxu0 0.0
    %430 = vmatprep.subr.mxu0 0.0
    %431 = vmatpush1.msra.mxu0 0.0
    %432 = vmatprep.subr.mxu0 0.0
    %433 = vmatpush1.msra.mxu0 0.0
    %434 = vmatprep.subr.mxu0 0.0
    %435 = vmatpush1.msra.mxu0 0.0
    %436 = vmatprep.mubr.f32.mxu0 0.0
    %437 = vmatmul.mubr.f32.gmra.mrb[0].mxu0 %v367
    %v438 = vpop.f32.mrb[0].mxu0
    %v439 = vadd.f32 %v358, %v438
    %v440 = vpop.f32.mrb[0].mxu0
    %441 = vmatprep.mubr.f32.mxu0 0.0
    %442 = vmatmul.mubr.f32.gmra.mrb[0].mxu0 %v370
    %v443 = vpop.f32.mrb[0].mxu0
    %v444 = vadd.f32 %v363, %v443
    %v445 = vpop.f32.mrb[0].mxu0
    %446 = vdwg.mxu0
    %s447 = scalar_lea.vmem [#allocation5], 32
    %v448 = vld [vmem:[%s447] sm:$0xff]
    %v449 = vld [vmem:[%s447 + $0x8] sm:$0xff]
    %v451 = vsel %vm101, %v448, 0
    %v454 = vsel %vm101, %v449, 0
    %456 = vmatprep.subr.mxu0 0.0
    %457 = vmatpush1.msra.mxu0 %v95
    %458 = vmatprep.subr.mxu0 0.0
    %459 = vmatpush1.msra.mxu0 %v96
    %460 = vmatprep.subr.mxu0 0.0
    %461 = vmatpush1.msra.mxu0 %v97
    %462 = vmatprep.subr.mxu0 0.0
    %463 = vmatpush1.msra.mxu0 %v98
    %464 = vmatprep.subr.mxu0 0.0
    %465 = vmatpush1.msra.mxu0 0.0
    %466 = vmatprep.subr.mxu0 0.0
    %467 = vmatpush1.msra.mxu0 0.0
    %468 = vmatprep.subr.mxu0 0.0
    %469 = vmatpush1.msra.mxu0 0.0
    %470 = vmatprep.subr.mxu0 0.0
    %471 = vmatpush1.msra.mxu0 0.0
    %472 = vmatprep.subr.mxu0 0.0
    %473 = vmatpush1.msra.mxu0 0.0
    %474 = vmatprep.subr.mxu0 0.0
    %475 = vmatpush1.msra.mxu0 0.0
    %476 = vmatprep.subr.mxu0 0.0
    %477 = vmatpush1.msra.mxu0 0.0
    %478 = vmatprep.subr.mxu0 0.0
    %479 = vmatpush1.msra.mxu0 0.0
    %480 = vmatprep.subr.mxu0 0.0
    %481 = vmatpush1.msra.mxu0 0.0
    %482 = vmatprep.subr.mxu0 0.0
    %483 = vmatpush1.msra.mxu0 0.0
    %484 = vmatprep.subr.mxu0 0.0
    %485 = vmatpush1.msra.mxu0 0.0
    %486 = vmatprep.subr.mxu0 0.0
    %487 = vmatpush1.msra.mxu0 0.0
    %488 = vmatprep.subr.mxu0 0.0
    %489 = vmatpush1.msra.mxu0 0.0
    %490 = vmatprep.subr.mxu0 0.0
    %491 = vmatpush1.msra.mxu0 0.0
    %492 = vmatprep.subr.mxu0 0.0
    %493 = vmatpush1.msra.mxu0 0.0
    %494 = vmatprep.subr.mxu0 0.0
    %495 = vmatpush1.msra.mxu0 0.0
    %496 = vmatprep.subr.mxu0 0.0
    %497 = vmatpush1.msra.mxu0 0.0
    %498 = vmatprep.subr.mxu0 0.0
    %499 = vmatpush1.msra.mxu0 0.0
    %500 = vmatprep.subr.mxu0 0.0
    %501 = vmatpush1.msra.mxu0 0.0
    %502 = vmatprep.subr.mxu0 0.0
    %503 = vmatpush1.msra.mxu0 0.0
    %504 = vmatprep.subr.mxu0 0.0
    %505 = vmatpush1.msra.mxu0 0.0
    %506 = vmatprep.subr.mxu0 0.0
    %507 = vmatpush1.msra.mxu0 0.0
    %508 = vmatprep.subr.mxu0 0.0
    %509 = vmatpush1.msra.mxu0 0.0
    %510 = vmatprep.subr.mxu0 0.0
    %511 = vmatpush1.msra.mxu0 0.0
    %512 = vmatprep.subr.mxu0 0.0
    %513 = vmatpush1.msra.mxu0 0.0
    %514 = vmatprep.subr.mxu0 0.0
    %515 = vmatpush1.msra.mxu0 0.0
    %516 = vmatprep.subr.mxu0 0.0
    %517 = vmatpush1.msra.mxu0 0.0
    %518 = vmatprep.subr.mxu0 0.0
    %519 = vmatpush1.msra.mxu0 0.0
    %520 = vmatprep.mubr.f32.mxu0 0.0
    %521 = vmatmul.mubr.f32.gmra.mrb[0].mxu0 %v451
    %v522 = vpop.f32.mrb[0].mxu0
    %v523 = vadd.f32 0.0, %v522
    %v524 = vpop.f32.mrb[0].mxu0
    %525 = vmatprep.mubr.f32.mxu0 0.0
    %526 = vmatmul.mubr.f32.gmra.mrb[0].mxu0 %v454
    %v527 = vpop.f32.mrb[0].mxu0
    %v528 = vadd.f32 0.0, %v527
    %v529 = vpop.f32.mrb[0].mxu0
    %530 = vdwg.mxu0
    %s531 = scalar_lea.vmem [#allocation7], 128
    %v532 = vld [vmem:[%s531] sm:$0xff]
    %v533 = vld [vmem:[%s531 + $0x8] sm:$0xff]
    %v534 = vld [vmem:[%s531 + $0x10] sm:$0xff]
    %v535 = vld [vmem:[%s531 + $0x18] sm:$0xff]
    %v536 = vld [vmem:[%s531 + $0x20] sm:$0xff]
    %v537 = vld [vmem:[%s531 + $0x28] sm:$0xff]
    %v538 = vld [vmem:[%s531 + $0x30] sm:$0xff]
    %v539 = vld [vmem:[%s531 + $0x38] sm:$0xff]
    %v541 = vsel %vm284, %v523, 0
    %v544 = vsel %vm284, %v528, 0
    %546 = vmatprep.subr.mxu0 0.0
    %547 = vmatpush1.msra.mxu0 %v532
    %548 = vmatprep.subr.mxu0 0.0
    %549 = vmatpush1.msra.mxu0 %v533
    %550 = vmatprep.subr.mxu0 0.0
    %551 = vmatpush1.msra.mxu0 %v534
    %552 = vmatprep.subr.mxu0 0.0
    %553 = vmatpush1.msra.mxu0 %v535
    %554 = vmatprep.subr.mxu0 0.0
    %555 = vmatpush1.msra.mxu0 %v536
    %556 = vmatprep.subr.mxu0 0.0
    %557 = vmatpush1.msra.mxu0 %v537
    %558 = vmatprep.subr.mxu0 0.0
    %559 = vmatpush1.msra.mxu0 %v538
    %560 = vmatprep.subr.mxu0 0.0
    %561 = vmatpush1.msra.mxu0 %v539
    %562 = vmatprep.subr.mxu0 0.0
    %563 = vmatpush1.msra.mxu0 0.0
    %564 = vmatprep.subr.mxu0 0.0
    %565 = vmatpush1.msra.mxu0 0.0
    %566 = vmatprep.subr.mxu0 0.0
    %567 = vmatpush1.msra.mxu0 0.0
    %568 = vmatprep.subr.mxu0 0.0
    %569 = vmatpush1.msra.mxu0 0.0
    %570 = vmatprep.subr.mxu0 0.0
    %571 = vmatpush1.msra.mxu0 0.0
    %572 = vmatprep.subr.mxu0 0.0
    %573 = vmatpush1.msra.mxu0 0.0
    %574 = vmatprep.subr.mxu0 0.0
    %575 = vmatpush1.msra.mxu0 0.0
    %576 = vmatprep.subr.mxu0 0.0
    %577 = vmatpush1.msra.mxu0 0.0
    %578 = vmatprep.subr.mxu0 0.0
    %579 = vmatpush1.msra.mxu0 0.0
    %580 = vmatprep.subr.mxu0 0.0
    %581 = vmatpush1.msra.mxu0 0.0
    %582 = vmatprep.subr.mxu0 0.0
    %583 = vmatpush1.msra.mxu0 0.0
    %584 = vmatprep.subr.mxu0 0.0
    %585 = vmatpush1.msra.mxu0 0.0
    %586 = vmatprep.subr.mxu0 0.0
    %587 = vmatpush1.msra.mxu0 0.0
    %588 = vmatprep.subr.mxu0 0.0
    %589 = vmatpush1.msra.mxu0 0.0
    %590 = vmatprep.subr.mxu0 0.0
    %591 = vmatpush1.msra.mxu0 0.0
    %592 = vmatprep.subr.mxu0 0.0
    %593 = vmatpush1.msra.mxu0 0.0
    %594 = vmatprep.subr.mxu0 0.0
    %595 = vmatpush1.msra.mxu0 0.0
    %596 = vmatprep.subr.mxu0 0.0
    %597 = vmatpush1.msra.mxu0 0.0
    %598 = vmatprep.subr.mxu0 0.0
    %599 = vmatpush1.msra.mxu0 0.0
    %600 = vmatprep.subr.mxu0 0.0
    %601 = vmatpush1.msra.mxu0 0.0
    %602 = vmatprep.subr.mxu0 0.0
    %603 = vmatpush1.msra.mxu0 0.0
    %604 = vmatprep.subr.mxu0 0.0
    %605 = vmatpush1.msra.mxu0 0.0
    %606 = vmatprep.subr.mxu0 0.0
    %607 = vmatpush1.msra.mxu0 0.0
    %608 = vmatprep.subr.mxu0 0.0
    %609 = vmatpush1.msra.mxu0 0.0
    %610 = vmatprep.mubr.f32.mxu0 0.0
    %611 = vmatmul.mubr.f32.gmra.mrb[0].mxu0 %v541
    %v612 = vpop.f32.mrb[0].mxu0
    %v613 = vadd.f32 0.0, %v612
    %v614 = vpop.f32.mrb[0].mxu0
    %615 = vmatprep.mubr.f32.mxu0 0.0
    %616 = vmatmul.mubr.f32.gmra.mrb[0].mxu0 %v544
    %v617 = vpop.f32.mrb[0].mxu0
    %v618 = vadd.f32 0.0, %v617
    %v619 = vpop.f32.mrb[0].mxu0
    %620 = vdwg.mxu0
    %v621 = vadd.f32 %v439, %v613
    %v622 = vadd.f32 %v444, %v618
    %v623 = vld [vmem:[%s3] sm:$0x1]
    %v625 = vlaneseq
    %v626 = vshrl.u32 %v625, 7
    %v627 = vsub.s32 0, %v626
    %v628 = vrot.slane %v623, %v627
    %v630 = vadd.f32 %v621, %v628
    %v631 = vadd.f32 %v622, %v628
    %v632 = vmax.f32 %v630, 0.0
    %v633 = vmax.f32 %v631, 0.0
    %v634 = vld [vmem:[#allocation8] sm:$0xff]
    %v635 = vld [vmem:[#allocation8 + $0x8] sm:$0xf]
    %vm636 = vcmask 130048
    %v638 = vsel %vm636, %v634, 0
    %v641 = vsel %vm636, %v635, 0
    %643 = vmatprep.subr.mxu0 0.0
    %644 = vmatpush1.msra.mxu0 %v632
    %645 = vmatprep.subr.mxu0 0.0
    %646 = vmatpush1.msra.mxu0 %v633
    %647 = vmatprep.subr.mxu0 0.0
    %648 = vmatpush1.msra.mxu0 0.0
    %649 = vmatprep.subr.mxu0 0.0
    %650 = vmatpush1.msra.mxu0 0.0
    %651 = vmatprep.subr.mxu0 0.0
    %652 = vmatpush1.msra.mxu0 0.0
    %653 = vmatprep.subr.mxu0 0.0
    %654 = vmatpush1.msra.mxu0 0.0
    %655 = vmatprep.subr.mxu0 0.0
    %656 = vmatpush1.msra.mxu0 0.0
    %657 = vmatprep.subr.mxu0 0.0
    %658 = vmatpush1.msra.mxu0 0.0
    %659 = vmatprep.subr.mxu0 0.0
    %660 = vmatpush1.msra.mxu0 0.0
    %661 = vmatprep.subr.mxu0 0.0
    %662 = vmatpush1.msra.mxu0 0.0
    %663 = vmatprep.subr.mxu0 0.0
    %664 = vmatpush1.msra.mxu0 0.0
    %665 = vmatprep.subr.mxu0 0.0
    %666 = vmatpush1.msra.mxu0 0.0
    %667 = vmatprep.subr.mxu0 0.0
    %668 = vmatpush1.msra.mxu0 0.0
    %669 = vmatprep.subr.mxu0 0.0
    %670 = vmatpush1.msra.mxu0 0.0
    %671 = vmatprep.subr.mxu0 0.0
    %672 = vmatpush1.msra.mxu0 0.0
    %673 = vmatprep.subr.mxu0 0.0
    %674 = vmatpush1.msra.mxu0 0.0
    %675 = vmatprep.subr.mxu0 0.0
    %676 = vmatpush1.msra.mxu0 0.0
    %677 = vmatprep.subr.mxu0 0.0
    %678 = vmatpush1.msra.mxu0 0.0
    %679 = vmatprep.subr.mxu0 0.0
    %680 = vmatpush1.msra.mxu0 0.0
    %681 = vmatprep.subr.mxu0 0.0
    %682 = vmatpush1.msra.mxu0 0.0
    %683 = vmatprep.subr.mxu0 0.0
    %684 = vmatpush1.msra.mxu0 0.0
    %685 = vmatprep.subr.mxu0 0.0
    %686 = vmatpush1.msra.mxu0 0.0
    %687 = vmatprep.subr.mxu0 0.0
    %688 = vmatpush1.msra.mxu0 0.0
    %689 = vmatprep.subr.mxu0 0.0
    %690 = vmatpush1.msra.mxu0 0.0
    %691 = vmatprep.subr.mxu0 0.0
    %692 = vmatpush1.msra.mxu0 0.0
    %693 = vmatprep.subr.mxu0 0.0
    %694 = vmatpush1.msra.mxu0 0.0
    %695 = vmatprep.subr.mxu0 0.0
    %696 = vmatpush1.msra.mxu0 0.0
    %697 = vmatprep.subr.mxu0 0.0
    %698 = vmatpush1.msra.mxu0 0.0
    %699 = vmatprep.subr.mxu0 0.0
    %700 = vmatpush1.msra.mxu0 0.0
    %701 = vmatprep.subr.mxu0 0.0
    %702 = vmatpush1.msra.mxu0 0.0
    %703 = vmatprep.subr.mxu0 0.0
    %704 = vmatpush1.msra.mxu0 0.0
    %705 = vmatprep.subr.mxu0 0.0
    %706 = vmatpush1.msra.mxu0 0.0
    %707 = vmatprep.mubr.f32.mxu0 0.0
    %708 = vmatmul.mubr.f32.gmra.mrb[0].mxu0 %v638
    %v709 = vpop.f32.mrb[0].mxu0
    %v710 = vadd.f32 0.0, %v709
    %v711 = vpop.f32.mrb[0].mxu0
    %712 = vmatprep.mubr.f32.mxu0 0.0
    %713 = vmatmul.mubr.f32.gmra.mrb[0].mxu0 %v641
    %v714 = vpop.f32.mrb[0].mxu0
    %v715 = vadd.f32 0.0, %v714
    %v716 = vpop.f32.mrb[0].mxu0
    %717 = vdwg.mxu0
    %v718 = vld [vmem:[#allocation10] sm:$0xff]
    %v719 = vld [vmem:[#allocation10 + $0x8] sm:$0xff]
    %v720 = vld [vmem:[#allocation10 + $0x10] sm:$0xff]
    %v721 = vld [vmem:[#allocation10 + $0x18] sm:$0xff]
    %v722 = vld [vmem:[#allocation10 + $0x20] sm:$0xff]
    %v723 = vld [vmem:[#allocation10 + $0x28] sm:$0xff]
    %v724 = vld [vmem:[#allocation10 + $0x30] sm:$0xff]
    %v725 = vld [vmem:[#allocation10 + $0x38] sm:$0xff]
    %s726 = scalar_lea.vmem [#allocation8], 16
    %v727 = vld [vmem:[%s726] sm:$0xff]
    %v728 = vld [vmem:[%s726 + $0x8] sm:$0xf]
    %v730 = vsel %vm636, %v727, 0
    %v733 = vsel %vm636, %v728, 0
    %735 = vmatprep.subr.mxu0 0.0
    %736 = vmatpush1.msra.mxu0 %v632
    %737 = vmatprep.subr.mxu0 0.0
    %738 = vmatpush1.msra.mxu0 %v633
    %739 = vmatprep.subr.mxu0 0.0
    %740 = vmatpush1.msra.mxu0 0.0
    %741 = vmatprep.subr.mxu0 0.0
    %742 = vmatpush1.msra.mxu0 0.0
    %743 = vmatprep.subr.mxu0 0.0
    %744 = vmatpush1.msra.mxu0 0.0
    %745 = vmatprep.subr.mxu0 0.0
    %746 = vmatpush1.msra.mxu0 0.0
    %747 = vmatprep.subr.mxu0 0.0
    %748 = vmatpush1.msra.mxu0 0.0
    %749 = vmatprep.subr.mxu0 0.0
    %750 = vmatpush1.msra.mxu0 0.0
    %751 = vmatprep.subr.mxu0 0.0
    %752 = vmatpush1.msra.mxu0 0.0
    %753 = vmatprep.subr.mxu0 0.0
    %754 = vmatpush1.msra.mxu0 0.0
    %755 = vmatprep.subr.mxu0 0.0
    %756 = vmatpush1.msra.mxu0 0.0
    %757 = vmatprep.subr.mxu0 0.0
    %758 = vmatpush1.msra.mxu0 0.0
    %759 = vmatprep.subr.mxu0 0.0
    %760 = vmatpush1.msra.mxu0 0.0
    %761 = vmatprep.subr.mxu0 0.0
    %762 = vmatpush1.msra.mxu0 0.0
    %763 = vmatprep.subr.mxu0 0.0
    %764 = vmatpush1.msra.mxu0 0.0
    %765 = vmatprep.subr.mxu0 0.0
    %766 = vmatpush1.msra.mxu0 0.0
    %767 = vmatprep.subr.mxu0 0.0
    %768 = vmatpush1.msra.mxu0 0.0
    %769 = vmatprep.subr.mxu0 0.0
    %770 = vmatpush1.msra.mxu0 0.0
    %771 = vmatprep.subr.mxu0 0.0
    %772 = vmatpush1.msra.mxu0 0.0
    %773 = vmatprep.subr.mxu0 0.0
    %774 = vmatpush1.msra.mxu0 0.0
    %775 = vmatprep.subr.mxu0 0.0
    %776 = vmatpush1.msra.mxu0 0.0
    %777 = vmatprep.subr.mxu0 0.0
    %778 = vmatpush1.msra.mxu0 0.0
    %779 = vmatprep.subr.mxu0 0.0
    %780 = vmatpush1.msra.mxu0 0.0
    %781 = vmatprep.subr.mxu0 0.0
    %782 = vmatpush1.msra.mxu0 0.0
    %783 = vmatprep.subr.mxu0 0.0
    %784 = vmatpush1.msra.mxu0 0.0
    %785 = vmatprep.subr.mxu0 0.0
    %786 = vmatpush1.msra.mxu0 0.0
    %787 = vmatprep.subr.mxu0 0.0
    %788 = vmatpush1.msra.mxu0 0.0
    %789 = vmatprep.subr.mxu0 0.0
    %790 = vmatpush1.msra.mxu0 0.0
    %791 = vmatprep.subr.mxu0 0.0
    %792 = vmatpush1.msra.mxu0 0.0
    %793 = vmatprep.subr.mxu0 0.0
    %794 = vmatpush1.msra.mxu0 0.0
    %795 = vmatprep.subr.mxu0 0.0
    %796 = vmatpush1.msra.mxu0 0.0
    %797 = vmatprep.subr.mxu0 0.0
    %798 = vmatpush1.msra.mxu0 0.0
    %799 = vmatprep.mubr.f32.mxu0 0.0
    %800 = vmatmul.mubr.f32.gmra.mrb[0].mxu0 %v730
    %v801 = vpop.f32.mrb[0].mxu0
    %v802 = vadd.f32 0.0, %v801
    %v803 = vpop.f32.mrb[0].mxu0
    %804 = vmatprep.mubr.f32.mxu0 0.0
    %805 = vmatmul.mubr.f32.gmra.mrb[0].mxu0 %v733
    %v806 = vpop.f32.mrb[0].mxu0
    %v807 = vadd.f32 0.0, %v806
    %v808 = vpop.f32.mrb[0].mxu0
    %809 = vdwg.mxu0
    %s810 = scalar_lea.vmem [#allocation10], 64
    %v811 = vld [vmem:[%s810] sm:$0xff]
    %v812 = vld [vmem:[%s810 + $0x8] sm:$0xff]
    %v813 = vld [vmem:[%s810 + $0x10] sm:$0xff]
    %v814 = vld [vmem:[%s810 + $0x18] sm:$0xff]
    %v815 = vld [vmem:[%s810 + $0x20] sm:$0xff]
    %v816 = vld [vmem:[%s810 + $0x28] sm:$0xff]
    %v817 = vld [vmem:[%s810 + $0x30] sm:$0xff]
    %v818 = vld [vmem:[%s810 + $0x38] sm:$0xff]
    %v820 = vsel %vm284, %v802, 0
    %v823 = vsel %vm284, %v807, 0
    %825 = vmatprep.subr.mxu0 0.0
    %826 = vmatpush1.msra.mxu0 %v811
    %827 = vmatprep.subr.mxu0 0.0
    %828 = vmatpush1.msra.mxu0 %v812
    %829 = vmatprep.subr.mxu0 0.0
    %830 = vmatpush1.msra.mxu0 %v813
    %831 = vmatprep.subr.mxu0 0.0
    %832 = vmatpush1.msra.mxu0 %v814
    %833 = vmatprep.subr.mxu0 0.0
    %834 = vmatpush1.msra.mxu0 %v815
    %835 = vmatprep.subr.mxu0 0.0
    %836 = vmatpush1.msra.mxu0 %v816
    %837 = vmatprep.subr.mxu0 0.0
    %838 = vmatpush1.msra.mxu0 %v817
    %839 = vmatprep.subr.mxu0 0.0
    %840 = vmatpush1.msra.mxu0 %v818
    %841 = vmatprep.subr.mxu0 0.0
    %842 = vmatpush1.msra.mxu0 0.0
    %843 = vmatprep.subr.mxu0 0.0
    %844 = vmatpush1.msra.mxu0 0.0
    %845 = vmatprep.subr.mxu0 0.0
    %846 = vmatpush1.msra.mxu0 0.0
    %847 = vmatprep.subr.mxu0 0.0
    %848 = vmatpush1.msra.mxu0 0.0
    %849 = vmatprep.subr.mxu0 0.0
    %850 = vmatpush1.msra.mxu0 0.0
    %851 = vmatprep.subr.mxu0 0.0
    %852 = vmatpush1.msra.mxu0 0.0
    %853 = vmatprep.subr.mxu0 0.0
    %854 = vmatpush1.msra.mxu0 0.0
    %855 = vmatprep.subr.mxu0 0.0
    %856 = vmatpush1.msra.mxu0 0.0
    %857 = vmatprep.subr.mxu0 0.0
    %858 = vmatpush1.msra.mxu0 0.0
    %859 = vmatprep.subr.mxu0 0.0
    %860 = vmatpush1.msra.mxu0 0.0
    %861 = vmatprep.subr.mxu0 0.0
    %862 = vmatpush1.msra.mxu0 0.0
    %863 = vmatprep.subr.mxu0 0.0
    %864 = vmatpush1.msra.mxu0 0.0
    %865 = vmatprep.subr.mxu0 0.0
    %866 = vmatpush1.msra.mxu0 0.0
    %867 = vmatprep.subr.mxu0 0.0
    %868 = vmatpush1.msra.mxu0 0.0
    %869 = vmatprep.subr.mxu0 0.0
    %870 = vmatpush1.msra.mxu0 0.0
    %871 = vmatprep.subr.mxu0 0.0
    %872 = vmatpush1.msra.mxu0 0.0
    %873 = vmatprep.subr.mxu0 0.0
    %874 = vmatpush1.msra.mxu0 0.0
    %875 = vmatprep.subr.mxu0 0.0
    %876 = vmatpush1.msra.mxu0 0.0
    %877 = vmatprep.subr.mxu0 0.0
    %878 = vmatpush1.msra.mxu0 0.0
    %879 = vmatprep.subr.mxu0 0.0
    %880 = vmatpush1.msra.mxu0 0.0
    %881 = vmatprep.subr.mxu0 0.0
    %882 = vmatpush1.msra.mxu0 0.0
    %883 = vmatprep.subr.mxu0 0.0
    %884 = vmatpush1.msra.mxu0 0.0
    %885 = vmatprep.subr.mxu0 0.0
    %886 = vmatpush1.msra.mxu0 0.0
    %887 = vmatprep.subr.mxu0 0.0
    %888 = vmatpush1.msra.mxu0 0.0
    %889 = vmatprep.mubr.f32.mxu0 0.0
    %890 = vmatmul.mubr.f32.gmra.mrb[0].mxu0 %v820
    %v891 = vpop.f32.mrb[0].mxu0
    %v892 = vadd.f32 0.0, %v891
    %v893 = vpop.f32.mrb[0].mxu0
    %894 = vmatprep.mubr.f32.mxu0 0.0
    %895 = vmatmul.mubr.f32.gmra.mrb[0].mxu0 %v823
    %v896 = vpop.f32.mrb[0].mxu0
    %v897 = vadd.f32 0.0, %v896
    %v898 = vpop.f32.mrb[0].mxu0
    %899 = vdwg.mxu0
    %v901 = vsel %vm284, %v710, 0
    %v904 = vsel %vm284, %v715, 0
    %906 = vmatprep.subr.mxu0 0.0
    %907 = vmatpush1.msra.mxu0 %v718
    %908 = vmatprep.subr.mxu0 0.0
    %909 = vmatpush1.msra.mxu0 %v719
    %910 = vmatprep.subr.mxu0 0.0
    %911 = vmatpush1.msra.mxu0 %v720
    %912 = vmatprep.subr.mxu0 0.0
    %913 = vmatpush1.msra.mxu0 %v721
    %914 = vmatprep.subr.mxu0 0.0
    %915 = vmatpush1.msra.mxu0 %v722
    %916 = vmatprep.subr.mxu0 0.0
    %917 = vmatpush1.msra.mxu0 %v723
    %918 = vmatprep.subr.mxu0 0.0
    %919 = vmatpush1.msra.mxu0 %v724
    %920 = vmatprep.subr.mxu0 0.0
    %921 = vmatpush1.msra.mxu0 %v725
    %922 = vmatprep.subr.mxu0 0.0
    %923 = vmatpush1.msra.mxu0 0.0
    %924 = vmatprep.subr.mxu0 0.0
    %925 = vmatpush1.msra.mxu0 0.0
    %926 = vmatprep.subr.mxu0 0.0
    %927 = vmatpush1.msra.mxu0 0.0
    %928 = vmatprep.subr.mxu0 0.0
    %929 = vmatpush1.msra.mxu0 0.0
    %930 = vmatprep.subr.mxu0 0.0
    %931 = vmatpush1.msra.mxu0 0.0
    %932 = vmatprep.subr.mxu0 0.0
    %933 = vmatpush1.msra.mxu0 0.0
    %934 = vmatprep.subr.mxu0 0.0
    %935 = vmatpush1.msra.mxu0 0.0
    %936 = vmatprep.subr.mxu0 0.0
    %937 = vmatpush1.msra.mxu0 0.0
    %938 = vmatprep.subr.mxu0 0.0
    %939 = vmatpush1.msra.mxu0 0.0
    %940 = vmatprep.subr.mxu0 0.0
    %941 = vmatpush1.msra.mxu0 0.0
    %942 = vmatprep.subr.mxu0 0.0
    %943 = vmatpush1.msra.mxu0 0.0
    %944 = vmatprep.subr.mxu0 0.0
    %945 = vmatpush1.msra.mxu0 0.0
    %946 = vmatprep.subr.mxu0 0.0
    %947 = vmatpush1.msra.mxu0 0.0
    %948 = vmatprep.subr.mxu0 0.0
    %949 = vmatpush1.msra.mxu0 0.0
    %950 = vmatprep.subr.mxu0 0.0
    %951 = vmatpush1.msra.mxu0 0.0
    %952 = vmatprep.subr.mxu0 0.0
    %953 = vmatpush1.msra.mxu0 0.0
    %954 = vmatprep.subr.mxu0 0.0
    %955 = vmatpush1.msra.mxu0 0.0
    %956 = vmatprep.subr.mxu0 0.0
    %957 = vmatpush1.msra.mxu0 0.0
    %958 = vmatprep.subr.mxu0 0.0
    %959 = vmatpush1.msra.mxu0 0.0
    %960 = vmatprep.subr.mxu0 0.0
    %961 = vmatpush1.msra.mxu0 0.0
    %962 = vmatprep.subr.mxu0 0.0
    %963 = vmatpush1.msra.mxu0 0.0
    %964 = vmatprep.subr.mxu0 0.0
    %965 = vmatpush1.msra.mxu0 0.0
    %966 = vmatprep.subr.mxu0 0.0
    %967 = vmatpush1.msra.mxu0 0.0
    %968 = vmatprep.subr.mxu0 0.0
    %969 = vmatpush1.msra.mxu0 0.0
    %970 = vmatprep.mubr.f32.mxu0 0.0
    %971 = vmatmul.mubr.f32.gmra.mrb[0].mxu0 %v901
    %v972 = vpop.f32.mrb[0].mxu0
    %v973 = vadd.f32 %v892, %v972
    %v974 = vpop.f32.mrb[0].mxu0
    %975 = vmatprep.mubr.f32.mxu0 0.0
    %976 = vmatmul.mubr.f32.gmra.mrb[0].mxu0 %v904
    %v977 = vpop.f32.mrb[0].mxu0
    %v978 = vadd.f32 %v897, %v977
    %v979 = vpop.f32.mrb[0].mxu0
    %980 = vdwg.mxu0
    %s981 = scalar_lea.vmem [#allocation8], 32
    %v982 = vld [vmem:[%s981] sm:$0xff]
    %v983 = vld [vmem:[%s981 + $0x8] sm:$0xf]
    %v985 = vsel %vm636, %v982, 0
    %v988 = vsel %vm636, %v983, 0
    %990 = vmatprep.subr.mxu0 0.0
    %991 = vmatpush1.msra.mxu0 %v632
    %992 = vmatprep.subr.mxu0 0.0
    %993 = vmatpush1.msra.mxu0 %v633
    %994 = vmatprep.subr.mxu0 0.0
    %995 = vmatpush1.msra.mxu0 0.0
    %996 = vmatprep.subr.mxu0 0.0
    %997 = vmatpush1.msra.mxu0 0.0
    %998 = vmatprep.subr.mxu0 0.0
    %999 = vmatpush1.msra.mxu0 0.0
    %1000 = vmatprep.subr.mxu0 0.0
    %1001 = vmatpush1.msra.mxu0 0.0
    %1002 = vmatprep.subr.mxu0 0.0
    %1003 = vmatpush1.msra.mxu0 0.0
    %1004 = vmatprep.subr.mxu0 0.0
    %1005 = vmatpush1.msra.mxu0 0.0
    %1006 = vmatprep.subr.mxu0 0.0
    %1007 = vmatpush1.msra.mxu0 0.0
    %1008 = vmatprep.subr.mxu0 0.0
    %1009 = vmatpush1.msra.mxu0 0.0
    %1010 = vmatprep.subr.mxu0 0.0
    %1011 = vmatpush1.msra.mxu0 0.0
    %1012 = vmatprep.subr.mxu0 0.0
    %1013 = vmatpush1.msra.mxu0 0.0
    %1014 = vmatprep.subr.mxu0 0.0
    %1015 = vmatpush1.msra.mxu0 0.0
    %1016 = vmatprep.subr.mxu0 0.0
    %1017 = vmatpush1.msra.mxu0 0.0
    %1018 = vmatprep.subr.mxu0 0.0
    %1019 = vmatpush1.msra.mxu0 0.0
    %1020 = vmatprep.subr.mxu0 0.0
    %1021 = vmatpush1.msra.mxu0 0.0
    %1022 = vmatprep.subr.mxu0 0.0
    %1023 = vmatpush1.msra.mxu0 0.0
    %1024 = vmatprep.subr.mxu0 0.0
    %1025 = vmatpush1.msra.mxu0 0.0
    %1026 = vmatprep.subr.mxu0 0.0
    %1027 = vmatpush1.msra.mxu0 0.0
    %1028 = vmatprep.subr.mxu0 0.0
    %1029 = vmatpush1.msra.mxu0 0.0
    %1030 = vmatprep.subr.mxu0 0.0
    %1031 = vmatpush1.msra.mxu0 0.0
    %1032 = vmatprep.subr.mxu0 0.0
    %1033 = vmatpush1.msra.mxu0 0.0
    %1034 = vmatprep.subr.mxu0 0.0
    %1035 = vmatpush1.msra.mxu0 0.0
    %1036 = vmatprep.subr.mxu0 0.0
    %1037 = vmatpush1.msra.mxu0 0.0
    %1038 = vmatprep.subr.mxu0 0.0
    %1039 = vmatpush1.msra.mxu0 0.0
    %1040 = vmatprep.subr.mxu0 0.0
    %1041 = vmatpush1.msra.mxu0 0.0
    %1042 = vmatprep.subr.mxu0 0.0
    %1043 = vmatpush1.msra.mxu0 0.0
    %1044 = vmatprep.subr.mxu0 0.0
    %1045 = vmatpush1.msra.mxu0 0.0
    %1046 = vmatprep.subr.mxu0 0.0
    %1047 = vmatpush1.msra.mxu0 0.0
    %1048 = vmatprep.subr.mxu0 0.0
    %1049 = vmatpush1.msra.mxu0 0.0
    %1050 = vmatprep.subr.mxu0 0.0
    %1051 = vmatpush1.msra.mxu0 0.0
    %1052 = vmatprep.subr.mxu0 0.0
    %1053 = vmatpush1.msra.mxu0 0.0
    %1054 = vmatprep.mubr.f32.mxu0 0.0
    %1055 = vmatmul.mubr.f32.gmra.mrb[0].mxu0 %v985
    %v1056 = vpop.f32.mrb[0].mxu0
    %v1057 = vadd.f32 0.0, %v1056
    %v1058 = vpop.f32.mrb[0].mxu0
    %1059 = vmatprep.mubr.f32.mxu0 0.0
    %1060 = vmatmul.mubr.f32.gmra.mrb[0].mxu0 %v988
    %v1061 = vpop.f32.mrb[0].mxu0
    %v1062 = vadd.f32 0.0, %v1061
    %v1063 = vpop.f32.mrb[0].mxu0
    %1064 = vdwg.mxu0
    %s1065 = scalar_lea.vmem [#allocation10], 128
    %v1066 = vld [vmem:[%s1065] sm:$0xff]
    %v1067 = vld [vmem:[%s1065 + $0x8] sm:$0xff]
    %v1068 = vld [vmem:[%s1065 + $0x10] sm:$0xff]
    %v1069 = vld [vmem:[%s1065 + $0x18] sm:$0xff]
    %v1070 = vld [vmem:[%s1065 + $0x20] sm:$0xff]
    %v1071 = vld [vmem:[%s1065 + $0x28] sm:$0xff]
    %v1072 = vld [vmem:[%s1065 + $0x30] sm:$0xff]
    %v1073 = vld [vmem:[%s1065 + $0x38] sm:$0xff]
    %v1075 = vsel %vm284, %v1057, 0
    %v1078 = vsel %vm284, %v1062, 0
    %1080 = vmatprep.subr.mxu0 0.0
    %1081 = vmatpush1.msra.mxu0 %v1066
    %1082 = vmatprep.subr.mxu0 0.0
    %1083 = vmatpush1.msra.mxu0 %v1067
    %1084 = vmatprep.subr.mxu0 0.0
    %1085 = vmatpush1.msra.mxu0 %v1068
    %1086 = vmatprep.subr.mxu0 0.0
    %1087 = vmatpush1.msra.mxu0 %v1069
    %1088 = vmatprep.subr.mxu0 0.0
    %1089 = vmatpush1.msra.mxu0 %v1070
    %1090 = vmatprep.subr.mxu0 0.0
    %1091 = vmatpush1.msra.mxu0 %v1071
    %1092 = vmatprep.subr.mxu0 0.0
    %1093 = vmatpush1.msra.mxu0 %v1072
    %1094 = vmatprep.subr.mxu0 0.0
    %1095 = vmatpush1.msra.mxu0 %v1073
    %1096 = vmatprep.subr.mxu0 0.0
    %1097 = vmatpush1.msra.mxu0 0.0
    %1098 = vmatprep.subr.mxu0 0.0
    %1099 = vmatpush1.msra.mxu0 0.0
    %1100 = vmatprep.subr.mxu0 0.0
    %1101 = vmatpush1.msra.mxu0 0.0
    %1102 = vmatprep.subr.mxu0 0.0
    %1103 = vmatpush1.msra.mxu0 0.0
    %1104 = vmatprep.subr.mxu0 0.0
    %1105 = vmatpush1.msra.mxu0 0.0
    %1106 = vmatprep.subr.mxu0 0.0
    %1107 = vmatpush1.msra.mxu0 0.0
    %1108 = vmatprep.subr.mxu0 0.0
    %1109 = vmatpush1.msra.mxu0 0.0
    %1110 = vmatprep.subr.mxu0 0.0
    %1111 = vmatpush1.msra.mxu0 0.0
    %1112 = vmatprep.subr.mxu0 0.0
    %1113 = vmatpush1.msra.mxu0 0.0
    %1114 = vmatprep.subr.mxu0 0.0
    %1115 = vmatpush1.msra.mxu0 0.0
    %1116 = vmatprep.subr.mxu0 0.0
    %1117 = vmatpush1.msra.mxu0 0.0
    %1118 = vmatprep.subr.mxu0 0.0
    %1119 = vmatpush1.msra.mxu0 0.0
    %1120 = vmatprep.subr.mxu0 0.0
    %1121 = vmatpush1.msra.mxu0 0.0
    %1122 = vmatprep.subr.mxu0 0.0
    %1123 = vmatpush1.msra.mxu0 0.0
    %1124 = vmatprep.subr.mxu0 0.0
    %1125 = vmatpush1.msra.mxu0 0.0
    %1126 = vmatprep.subr.mxu0 0.0
    %1127 = vmatpush1.msra.mxu0 0.0
    %1128 = vmatprep.subr.mxu0 0.0
    %1129 = vmatpush1.msra.mxu0 0.0
    %1130 = vmatprep.subr.mxu0 0.0
    %1131 = vmatpush1.msra.mxu0 0.0
    %1132 = vmatprep.subr.mxu0 0.0
    %1133 = vmatpush1.msra.mxu0 0.0
    %1134 = vmatprep.subr.mxu0 0.0
    %1135 = vmatpush1.msra.mxu0 0.0
    %1136 = vmatprep.subr.mxu0 0.0
    %1137 = vmatpush1.msra.mxu0 0.0
    %1138 = vmatprep.subr.mxu0 0.0
    %1139 = vmatpush1.msra.mxu0 0.0
    %1140 = vmatprep.subr.mxu0 0.0
    %1141 = vmatpush1.msra.mxu0 0.0
    %1142 = vmatprep.subr.mxu0 0.0
    %1143 = vmatpush1.msra.mxu0 0.0
    %1144 = vmatprep.mubr.f32.mxu0 0.0
    %1145 = vmatmul.mubr.f32.gmra.mrb[0].mxu0 %v1075
    %v1146 = vpop.f32.mrb[0].mxu0
    %v1147 = vadd.f32 0.0, %v1146
    %v1148 = vpop.f32.mrb[0].mxu0
    %1149 = vmatprep.mubr.f32.mxu0 0.0
    %1150 = vmatmul.mubr.f32.gmra.mrb[0].mxu0 %v1078
    %v1151 = vpop.f32.mrb[0].mxu0
    %v1152 = vadd.f32 0.0, %v1151
    %v1153 = vpop.f32.mrb[0].mxu0
    %1154 = vdwg.mxu0
    %v1155 = vadd.f32 %v973, %v1147
    %v1156 = vadd.f32 %v978, %v1152
    %v1157 = vld [vmem:[%s6] sm:$0x1]
    %v1159 = vlaneseq
    %v1160 = vshrl.u32 %v1159, 7
    %v1161 = vsub.s32 0, %v1160
    %v1162 = vrot.slane %v1157, %v1161
    %v1164 = vadd.f32 %v1155, %v1162
    %v1165 = vadd.f32 %v1156, %v1162
    %v1166 = vmax.f32 %v1164, 0.0
    %v1167 = vmax.f32 %v1165, 0.0
    %vm1168 = vcmask 785408
    %1169 = vst.msk [vmem:[#allocation11] sm:$0xff] %vm1168, %v1166
    %vm1170 = vcmask 781312
    %1171 = vst.msk [vmem:[#allocation11 + $0x8] sm:$0xf] %vm1170, %v1167
    // Predicated region
    $region50: #{tpu_custom_call.1} parent=1 // pred_check
      _
    $region51: #{tpu_custom_call.1} parent=1 // pred_check_branch
      %1173 = sbr.rel (0) target = $region53
    $region52: #{tpu_custom_call.1} parent=1 // pred_region
      %s1175 = ssub.s32 256, 256
      %1176 = vsyncadd [#allocation4], %s1175
      %s1177 = sshll.u32 [#allocation11], 4
      %s1178 = int_to_ptr.vmem [resolvable:$true] %s1177
      %1183 = dma.vmem_to_hbm [thread:$0]  %s1178, 256, %s7, [#allocation4], 128, 128, 8
    $region53: #{tpu_custom_call.1} parent=1 // pred_fallthru
      _
    // Predicated region
    $region54: #{tpu_custom_call.1} parent=1 // pred_check
      _
    $region55: #{tpu_custom_call.1} parent=1 // pred_check_branch
      %1185 = sbr.rel (0) target = $region57
    $region56: #{tpu_custom_call.1} parent=1 // pred_region
      %1186 = dma.done [#allocation4], 256
    $region57: #{tpu_custom_call.1} parent=1 // pred_fallthru
      _
    %1187 = vsyncpa [#allocation3], 1
    %1188 = vsyncpa [#allocation6], 1
    %1189 = vsyncpa [#allocation9], 1
    %1190 = vsyncpa [#allocation4], 1

</llo_original>
